<compile_context>
chip_gen: v6e
topology: v6e:2x2x1
jax: 0.10.0
libtpu: 0.0.40
codegen_flags: <defaults>
</compile_context>

<pallas_src>
import jax
import jax.numpy as jnp
from jax.experimental import pallas as pl
from jax.experimental.pallas import tpu as pltpu


def _round_up(x, m):
    return ((x + m - 1) // m) * m


def _pick_tile(n, align, cap):
    """Largest multiple of `align` that divides n and is <= cap.

    `n` is already a multiple of `align`, so `align` is always a valid answer.
    """
    if n <= cap:
        return n
    best = align
    d = align
    while d <= cap:
        if n % d == 0:
            best = d
        d += align
    return best


def residual_block_kernel(x_ref, w_ref, b_ref, o_ref, acc_ref, res_ref):
    j = pl.program_id(1)
    k = pl.program_id(2)

    @pl.when(k == 0)
    def _():
        # Bias-init: fold the "+ b'" into the accumulator init (same cost as a
        # zero fill, removes one VPU add pass per output tile).
        acc_ref[...] = jnp.broadcast_to(b_ref[...], acc_ref.shape)

    @pl.when(k == j)
    def _():
        # tn == tk, so the LHS tile at k == j is exactly the (i, j) residual
        # tile: stash it instead of streaming x a second time from HBM.
        res_ref[...] = x_ref[...]

    # MXU matmul in the operands' native (compute) dtype, f32 accumulation.
    acc_ref[...] += jnp.dot(x_ref[...], w_ref[...],
                            preferred_element_type=jnp.float32)

    @pl.when(k == pl.num_programs(2) - 1)
    def _():
        y = jnp.maximum(acc_ref[...], 0.0)                     # ReLU
        # Dropout(0.2) is identity in eval mode.
        o_ref[...] = (res_ref[...].astype(jnp.float32) + y).astype(o_ref.dtype)


def fold_bn_into_linear(weight, bias, gamma, beta, running_mean, running_var,
                        eps=1e-5):
    """Fold eval-mode BatchNorm1d + Linear bias into (W', b') once, in f32.

    y = BN(x @ W^T + b) = x @ W' + b'  with
      scale   = gamma * rsqrt(var + eps)
      W'[k,j] = W[j,k] * scale[j]        (W^T with each output column scaled)
      b'      = (b - mean) * scale + beta
    """
    w32 = weight.astype(jnp.float32)
    scale = gamma.astype(jnp.float32) * jax.lax.rsqrt(
        running_var.astype(jnp.float32) + jnp.float32(eps))                # (F,)
    w_folded = (w32 * scale[:, None]).T                                    # (in, out)
    b_folded = (bias.astype(jnp.float32)
                - running_mean.astype(jnp.float32)) * scale \
        + beta.astype(jnp.float32)                                         # (F,)
    return w_folded, b_folded


def residual_block(x, w_folded, b_folded, *, compute_dtype=jnp.bfloat16,
                   tm_cap=None, tf_cap=512):
    """x: (B, F); w_folded: (F, F) in (in, out) layout (f32); b_folded: (F,) f32."""
    B, F = x.shape
    assert w_folded.shape == (F, F) and b_folded.shape == (F,)

    compute_dtype = jnp.dtype(compute_dtype)
    out_dtype = jnp.dtype(x.dtype)
    c_item = compute_dtype.itemsize
    o_item = out_dtype.itemsize
    is_bf16 = compute_dtype == jnp.dtype(jnp.bfloat16)

    # Pad only to hardware granules: features -> 128 lanes, batch -> 8 sublanes
    # (16 rows for bf16 sublane packing).  Tiles then evenly divide the padded
    # dims, so no tile-multiple over-padding.
    sub = 16 if is_bf16 else 8
    Fp = _round_up(F, 128)
    Bp = _round_up(B, sub)

    if tm_cap is None:
        # Large-batch regime: grow tm first -- W is re-streamed once per row
        # tile, so tm directly divides weight HBM traffic.
        tm_cap = 512 if is_bf16 else 256

    # N and K share one feature tile (residual block: N == K == F), which both
    # collapses the K axis when Fp <= tf_cap and enables the residual-via-LHS
    # reuse in the kernel.
    tf = _pick_tile(Fp, 128, tf_cap)
    tm = _pick_tile(Bp, sub, tm_cap)
    if Bp > tm_cap and tm < 64:
        # Awkward divisor (e.g. Bp = 8 * large prime): pay a little extra row
        # padding rather than running with a tiny M tile.
        tm = tm_cap
        Bp = _round_up(Bp, tm)

    x_p = jnp.pad(x, ((0, Bp - B), (0, Fp - F))).astype(compute_dtype)
    w_p = jnp.pad(w_folded.astype(compute_dtype), ((0, Fp - F), (0, Fp - F)))
    b_p = jnp.pad(b_folded.astype(jnp.float32), ((0, Fp - F),)).reshape(1, Fp)

    grid_m, grid_f = Bp // tm, Fp // tf
    grid = (grid_m, grid_f, grid_f)

    # Small-batch regime: a single short M tile makes the W stream the exposed
    # DMA; a third buffer on the weight BlockSpec helps hide it.
    if grid_m == 1 and grid_f > 2:
        w_spec = pl.BlockSpec((tf, tf), lambda i, j, k: (k, j),
                              pipeline_mode=pl.Buffered(3))
    else:
        w_spec = pl.BlockSpec((tf, tf), lambda i, j, k: (k, j))

    # Double-buffered streamed tiles + f32 accumulator + residual stash.
    footprint = (2 * tm * tf * c_item      # x LHS
                 + 2 * tf * tf * c_item    # folded weight
                 + 2 * tf * 4              # fused bias (f32)
                 + 2 * tm * tf * o_item    # output
                 + tm * tf * 4             # f32 accumulator
                 + tm * tf * c_item)       # residual stash
    vmem_limit = int(min(64 * 1024 * 1024, max(32 * 1024 * 1024, 4 * footprint)))

    out_p = pl.pallas_call(
        residual_block_kernel,
        out_shape=jax.ShapeDtypeStruct((Bp, Fp), out_dtype),
        grid_spec=pltpu.PrefetchScalarGridSpec(
            num_scalar_prefetch=0,
            grid=grid,
            in_specs=[
                pl.BlockSpec((tm, tf), lambda i, j, k: (i, k)),   # x (matmul LHS)
                w_spec,                                           # folded weight
                pl.BlockSpec((1, tf), lambda i, j, k: (0, j)),    # fused bias
            ],
            out_specs=pl.BlockSpec((tm, tf), lambda i, j, k: (i, j)),
            scratch_shapes=[pltpu.VMEM((tm, tf), jnp.float32),    # accumulator
                            pltpu.VMEM((tm, tf), compute_dtype)], # residual stash
        ),
        compiler_params=pltpu.CompilerParams(
            dimension_semantics=("parallel", "parallel", "arbitrary"),
            vmem_limit_bytes=vmem_limit),
        cost_estimate=pl.CostEstimate(
            flops=2 * Bp * Fp * Fp,
            transcendentals=0,
            bytes_accessed=(Bp * Fp * c_item * grid_f     # x LHS, once per j tile
                            + Fp * Fp * c_item * grid_m   # W, once per i tile
                            + Bp * Fp * o_item            # output
                            + Fp * 4)),                   # bias
    )(x_p, w_p, b_p)

    return out_p[:B, :F]


def reference(x, weight, bias, gamma, beta, running_mean, running_var):
    y = x @ weight.T + bias
    eps = 1e-5
    y = (y - running_mean) / jnp.sqrt(running_var + eps) * gamma + beta
    y = jnp.maximum(y, 0.0)
    return x + y


if __name__ == "__main__":
    B, F = 8, 32   # batch=8, in_features=32 (small demo shapes)

    key = jax.random.PRNGKey(0)
    kx, kw, kb, km, kv, kg, kbt = jax.random.split(key, 7)

    x = jax.random.normal(kx, (B, F), dtype=jnp.float32)

    # Deterministic synthetic parameters (nn.Linear(F, F), nn.BatchNorm1d(F)).
    bound = 1.0 / jnp.sqrt(jnp.float32(F))
    weight = jax.random.uniform(kw, (F, F), minval=-bound, maxval=bound,
                                dtype=jnp.float32)
    bias = jax.random.uniform(kb, (F,), minval=-bound, maxval=bound,
                              dtype=jnp.float32)
    gamma = 1.0 + 0.1 * jax.random.normal(kg, (F,), dtype=jnp.float32)
    beta = 0.1 * jax.random.normal(kbt, (F,), dtype=jnp.float32)
    running_mean = 0.1 * jax.random.normal(km, (F,), dtype=jnp.float32)
    running_var = jnp.abs(jax.random.normal(kv, (F,), dtype=jnp.float32)) + 0.5

    # Fold BN + bias into the weight once (constant in eval mode).
    w_folded, b_folded = fold_bn_into_linear(
        weight, bias, gamma, beta, running_mean, running_var)

    ref = reference(x, weight, bias, gamma, beta, running_mean, running_var)

    # f32 MXU path: should match the f32 reference tightly.
    out_f32 = residual_block(x, w_folded, b_folded, compute_dtype=jnp.float32)
    out_f32 = jax.block_until_ready(out_f32)
    assert jnp.allclose(out_f32, ref, atol=1e-4, rtol=1e-4), "f32 mismatch"

    # bf16 MXU path (default): ~3-4x MXU rate, half the x/W HBM bytes; the
    # folded scale is quantized into the weight so tolerance is looser.
    out_bf16 = residual_block(x, w_folded, b_folded)
    out_bf16 = jax.block_until_ready(out_bf16)
    assert jnp.allclose(out_bf16, ref, atol=1e-1, rtol=1e-2), "bf16 mismatch"

    print("KERNEL_OK")
</pallas_src>

<mosaic_0001>
module attributes {stable_mosaic.version = 11 : i64} {
  func.func @residual_block_kernel(%arg0: i32, %arg1: i32, %arg2: i32, %arg3: memref<8x128xf32, #tpu.memory_space<vmem>>, %arg4: memref<128x128xf32, #tpu.memory_space<vmem>>, %arg5: memref<1x128xf32, #tpu.memory_space<vmem>>, %arg6: memref<8x128xf32, #tpu.memory_space<vmem>>, %arg7: memref<8x128xf32, #tpu.memory_space<vmem>>, %arg8: memref<8x128xf32, #tpu.memory_space<vmem>>) attributes {dimension_semantics = [#tpu.dimension_semantics<parallel>, #tpu.dimension_semantics<parallel>, #tpu.dimension_semantics<arbitrary>], iteration_bounds = array<i64: 1, 1, 1>, scalar_prefetch = 0 : i64, scratch_operands = 2 : i64, tpu.core_type = #tpu.core_type<tc>, window_params = [{transform_indices = @transform_0, window_bounds = array<i64: 8, 128>}, {transform_indices = @transform_1, window_bounds = array<i64: 128, 128>}, {transform_indices = @transform_2, window_bounds = array<i64: 1, 128>}, {transform_indices = @transform_3, window_bounds = array<i64: 8, 128>}]} {
    %c0_i32 = arith.constant 0 : i32
    %0 = arith.cmpi eq, %arg2, %c0_i32 : i32
    %1 = arith.extui %0 : i1 to i32
    %c0_i32_0 = arith.constant 0 : i32
    %2 = arith.cmpi ne, %1, %c0_i32_0 : i32
    scf.if %2 {
      %c0_11 = arith.constant 0 : index
      %c0_12 = arith.constant 0 : index
      %15 = vector.load %arg5[%c0_11, %c0_12] : memref<1x128xf32, #tpu.memory_space<vmem>>, vector<1x128xf32>
      %16 = vector.shape_cast %15 : vector<1x128xf32> to vector<1x128xf32>
      %17 = vector.broadcast %16 : vector<1x128xf32> to vector<8x128xf32>
      %c0_13 = arith.constant 0 : index
      %c0_14 = arith.constant 0 : index
      %18 = vector.load %arg7[%c0_13, %c0_14] : memref<8x128xf32, #tpu.memory_space<vmem>>, vector<8x128xf32>
      tpu.vector_store %arg7[%c0_13, %c0_14], %17 {strides = array<i32>} : memref<8x128xf32, #tpu.memory_space<vmem>>, vector<8x128xf32>,
    } else {
    }
    %3 = arith.cmpi eq, %arg2, %arg1 : i32
    %4 = arith.extui %3 : i1 to i32
    %c0_i32_1 = arith.constant 0 : i32
    %5 = arith.cmpi ne, %4, %c0_i32_1 : i32
    scf.if %5 {
      %c0_11 = arith.constant 0 : index
      %c0_12 = arith.constant 0 : index
      %15 = vector.load %arg3[%c0_11, %c0_12] : memref<8x128xf32, #tpu.memory_space<vmem>>, vector<8x128xf32>
      %c0_13 = arith.constant 0 : index
      %c0_14 = arith.constant 0 : index
      %16 = vector.load %arg8[%c0_13, %c0_14] : memref<8x128xf32, #tpu.memory_space<vmem>>, vector<8x128xf32>
      tpu.vector_store %arg8[%c0_13, %c0_14], %15 {strides = array<i32>} : memref<8x128xf32, #tpu.memory_space<vmem>>, vector<8x128xf32>,
    } else {
    }
    %c0 = arith.constant 0 : index
    %c0_2 = arith.constant 0 : index
    %6 = vector.load %arg7[%c0, %c0_2] : memref<8x128xf32, #tpu.memory_space<vmem>>, vector<8x128xf32>
    %c0_3 = arith.constant 0 : index
    %c0_4 = arith.constant 0 : index
    %7 = vector.load %arg3[%c0_3, %c0_4] : memref<8x128xf32, #tpu.memory_space<vmem>>, vector<8x128xf32>
    %c0_5 = arith.constant 0 : index
    %c0_6 = arith.constant 0 : index
    %8 = vector.load %arg4[%c0_5, %c0_6] : memref<128x128xf32, #tpu.memory_space<vmem>>, vector<128x128xf32>
    %cst = arith.constant dense<0.000000e+00> : vector<8x128xf32>
    %9 = tpu.matmul %7, %8, %cst {dimension_numbers = #tpu.dot_dimension_numbers<[1], [0], [0], [1], [0, 0, 1, 1], [], []>} : vector<8x128xf32>, vector<128x128xf32>, vector<8x128xf32> -> vector<8x128xf32>
    %10 = arith.addf %6, %9 : vector<8x128xf32>
    %c0_7 = arith.constant 0 : index
    %c0_8 = arith.constant 0 : index
    %11 = vector.load %arg7[%c0_7, %c0_8] : memref<8x128xf32, #tpu.memory_space<vmem>>, vector<8x128xf32>
    tpu.vector_store %arg7[%c0_7, %c0_8], %10 {strides = array<i32>} : memref<8x128xf32, #tpu.memory_space<vmem>>, vector<8x128xf32>,
    %c0_i32_9 = arith.constant 0 : i32
    %12 = arith.cmpi eq, %arg2, %c0_i32_9 : i32
    %13 = arith.extui %12 : i1 to i32
    %c0_i32_10 = arith.constant 0 : i32
    %14 = arith.cmpi ne, %13, %c0_i32_10 : i32
    scf.if %14 {
      %c0_11 = arith.constant 0 : index
      %c0_12 = arith.constant 0 : index
      %15 = vector.load %arg7[%c0_11, %c0_12] : memref<8x128xf32, #tpu.memory_space<vmem>>, vector<8x128xf32>
      %cst_13 = arith.constant 0.000000e+00 : f32
      %16 = vector.broadcast %cst_13 : f32 to vector<8x128xf32>
      %17 = arith.maximumf %15, %16 : vector<8x128xf32>
      %c0_14 = arith.constant 0 : index
      %c0_15 = arith.constant 0 : index
      %18 = vector.load %arg8[%c0_14, %c0_15] : memref<8x128xf32, #tpu.memory_space<vmem>>, vector<8x128xf32>
      %19 = arith.addf %18, %17 : vector<8x128xf32>
      %c0_16 = arith.constant 0 : index
      %c0_17 = arith.constant 0 : index
      %20 = vector.load %arg6[%c0_16, %c0_17] : memref<8x128xf32, #tpu.memory_space<vmem>>, vector<8x128xf32>
      tpu.vector_store %arg6[%c0_16, %c0_17], %19 {strides = array<i32>} : memref<8x128xf32, #tpu.memory_space<vmem>>, vector<8x128xf32>,
    } else {
    }
    return
  }
  func.func @transform_0(%arg0: i32, %arg1: i32, %arg2: i32) -> (i32, i32) {
    %c0_i32 = arith.constant 0 : i32
    return %arg0, %arg2 : i32, i32
  }
  func.func @transform_1(%arg0: i32, %arg1: i32, %arg2: i32) -> (i32, i32) {
    %c0_i32 = arith.constant 0 : i32
    return %arg2, %arg1 : i32, i32
  }
  func.func @transform_2(%arg0: i32, %arg1: i32, %arg2: i32) -> (i32, i32) {
    %c0_i32 = arith.constant 0 : i32
    %c0_i32_0 = arith.constant 0 : i32
    return %c0_i32, %arg1 : i32, i32
  }
  func.func @transform_3(%arg0: i32, %arg1: i32, %arg2: i32) -> (i32, i32) {
    %c0_i32 = arith.constant 0 : i32
    return %arg0, %arg1 : i32, i32
  }
}

</mosaic_0001>

<llo_original>
// kernel: tpu_custom_call.1
$region0: #{tpu_custom_call.1}
  #allocation0 [shape = 'u32[]', space=smem, size = 0x4, offset = 0x4, fixed_abs, tag = 'smem constant byte address 0x4 - core index']
  #allocation1 [shape = 'u32[144,128]{1,0:T(1,128)}', space=vmem, size = 0x12000, scoped, tag = 'internal scratch']
  #allocation2 [shape = 'f32[8,128]{1,0:T(8,128)}', space=vmem, size = 0x1000, scoped, tag = 'scratch operand']
  #allocation3 [shape = 'f32[8,128]{1,0:T(8,128)}', space=vmem, size = 0x1000, scoped, tag = 'scratch operand']
  %s0 = inlined_call_operand.hbm [shape: f32[8,128], index: 0, kind: input, shape index: {}]
  %s1 = inlined_call_operand.hbm [shape: f32[128,128], index: 1, kind: input, shape index: {}]
  %s2 = inlined_call_operand.vmem [shape: f32[1,128], index: 2, kind: input, shape index: {}]
  %s3 = inlined_call_operand.hbm [shape: f32[8,128], index: 3, kind: output, shape index: {}]
  %s4 = sld [smem:[#allocation0]]
  $region42: #{tpu_custom_call.1} parent=0
    _
  %s6 = ssub.s32 1, %s4
  %s7 = scalar_select 0, %s6, %s4
  $region1: #{tpu_custom_call.1} parent=0
    #allocation4 [shape = 'u8[4096]{0}', space=vmem, size = 0x1000, scoped, tag = 'input window, operand 0, single buffered']
    #allocation5 [shape = 's32[1]{0}', space=sflag, size = 0x4, scoped, tag = 'scoped memory for tpu_custom_call.1']
    #allocation6 [shape = 's32[1]{0}', space=sflag, size = 0x4, scoped, tag = 'scoped memory for tpu_custom_call.1']
    #allocation7 [shape = 'u8[65536]{0}', space=vmem, size = 0x10000, scoped, tag = 'input window, operand 1, single buffered']
    #allocation8 [shape = 's32[1]{0}', space=sflag, size = 0x4, scoped, tag = 'scoped memory for tpu_custom_call.1']
    #allocation9 [shape = 'u8[4096]{0}', space=vmem, size = 0x1000, scoped, tag = 'output window, operand 0, single buffered']
    %8 = vsyncpa [#allocation5], 0
    %9 = vsyncpa [#allocation8], 0
    %10 = vsyncpa [#allocation6], 0
    // Predicated region
    $region2: #{tpu_custom_call.1} parent=1 // pred_check
      _
    $region3: #{tpu_custom_call.1} parent=1 // pred_check_branch
      %12 = sbr.rel (0) target = $region5
    $region4: #{tpu_custom_call.1} parent=1 // pred_region
      %s14 = ssub.s32 128, 128
      %15 = vsyncadd [#allocation5], %s14
      %s17 = sshll.u32 [#allocation4], 4
      %s18 = int_to_ptr.vmem [resolvable:$true] %s17
      %20 = dma.hbm_to_vmem [thread:$0]  %s0, 128, %s18, [#allocation5]
    $region5: #{tpu_custom_call.1} parent=1 // pred_fallthru
      _
    // Predicated region
    $region6: #{tpu_custom_call.1} parent=1 // pred_check
      _
    $region7: #{tpu_custom_call.1} parent=1 // pred_check_branch
      %22 = sbr.rel (0) target = $region9
    $region8: #{tpu_custom_call.1} parent=1 // pred_region
      %s24 = ssub.s32 2048, 2048
      %25 = vsyncadd [#allocation8], %s24
      %s26 = sshll.u32 [#allocation7], 4
      %s27 = int_to_ptr.vmem [resolvable:$true] %s26
      %32 = dma.hbm_to_vmem [thread:$0]  %s1, 2048, %s27, [#allocation8], 128, 128, 8
    $region9: #{tpu_custom_call.1} parent=1 // pred_fallthru
      _
    // Predicated region
    $region10: #{tpu_custom_call.1} parent=1 // pred_check
      _
    $region11: #{tpu_custom_call.1} parent=1 // pred_check_branch
      %34 = sbr.rel (0) target = $region13
    $region12: #{tpu_custom_call.1} parent=1 // pred_region
      _
    $region13: #{tpu_custom_call.1} parent=1 // pred_fallthru
      _
    // Predicated region
    $region14: #{tpu_custom_call.1} parent=1 // pred_check
      _
    $region15: #{tpu_custom_call.1} parent=1 // pred_check_branch
      %36 = sbr.rel (0) target = $region17
    $region16: #{tpu_custom_call.1} parent=1 // pred_region
      %37 = dma.done [#allocation5], 128
    $region17: #{tpu_custom_call.1} parent=1 // pred_fallthru
      _
    // Predicated region
    $region18: #{tpu_custom_call.1} parent=1 // pred_check
      _
    $region19: #{tpu_custom_call.1} parent=1 // pred_check_branch
      %39 = sbr.rel (0) target = $region21
    $region20: #{tpu_custom_call.1} parent=1 // pred_region
      %40 = dma.done [#allocation8], 2048
    $region21: #{tpu_custom_call.1} parent=1 // pred_fallthru
      _
    %p41 = scmp.eq.s32.totalorder 0, 0
    // Predicated region
    $region22: #{tpu_custom_call.1} parent=1 // pred_check
      %p42 = pneg %p41
    $region23: #{tpu_custom_call.1} parent=1 // pred_check_branch
      %44 = sbr.rel (%p42) target = $region25
    $region24: #{tpu_custom_call.1} parent=1 // pred_region
      %v45 = vld [vmem:[%s2] sm:$0x1]
      %v47 = vlaneseq
      %v48 = vshrl.u32 %v47, 7
      %v49 = vsub.s32 0, %v48
      %v50 = vrot.slane %v45, %v49
      %52 = vst [vmem:[#allocation2] sm:$0xff] %v50
    $region25: #{tpu_custom_call.1} parent=1 // pred_fallthru
      _
    %p53 = scmp.eq.s32.totalorder 0, 0
    // Predicated region
    $region26: #{tpu_custom_call.1} parent=1 // pred_check
      %p54 = pneg %p53
    $region27: #{tpu_custom_call.1} parent=1 // pred_check_branch
      %56 = sbr.rel (%p54) target = $region29
    $region28: #{tpu_custom_call.1} parent=1 // pred_region
      %v57 = vld [vmem:[#allocation4] sm:$0xff]
      %58 = vst [vmem:[#allocation3] sm:$0xff] %v57
    $region29: #{tpu_custom_call.1} parent=1 // pred_fallthru
      _
    %v59 = vld [vmem:[#allocation2] sm:$0xff]
    %v60 = vld [vmem:[#allocation4] sm:$0xff]
    %v61 = vld [vmem:[#allocation7] sm:$0xff]
    %v62 = vld [vmem:[#allocation7 + $0x8] sm:$0xff]
    %v63 = vld [vmem:[#allocation7 + $0x10] sm:$0xff]
    %v64 = vld [vmem:[#allocation7 + $0x18] sm:$0xff]
    %v65 = vld [vmem:[#allocation7 + $0x20] sm:$0xff]
    %v66 = vld [vmem:[#allocation7 + $0x28] sm:$0xff]
    %v67 = vld [vmem:[#allocation7 + $0x30] sm:$0xff]
    %v68 = vld [vmem:[#allocation7 + $0x38] sm:$0xff]
    %v69 = vld [vmem:[#allocation7 + $0x40] sm:$0xff]
    %v70 = vld [vmem:[#allocation7 + $0x48] sm:$0xff]
    %v71 = vld [vmem:[#allocation7 + $0x50] sm:$0xff]
    %v72 = vld [vmem:[#allocation7 + $0x58] sm:$0xff]
    %v73 = vld [vmem:[#allocation7 + $0x60] sm:$0xff]
    %v74 = vld [vmem:[#allocation7 + $0x68] sm:$0xff]
    %v75 = vld [vmem:[#allocation7 + $0x70] sm:$0xff]
    %v76 = vld [vmem:[#allocation7 + $0x78] sm:$0xff]
    %77 = vmatprep.subr.mxu0 0.0
    %78 = vmatpush1.msra.mxu0 %v76
    %79 = vmatprep.subr.mxu0 0.0
    %80 = vmatpush1.msra.mxu0 %v75
    %81 = vmatprep.subr.mxu0 0.0
    %82 = vmatpush1.msra.mxu0 %v74
    %83 = vmatprep.subr.mxu0 0.0
    %84 = vmatpush1.msra.mxu0 %v73
    %85 = vmatprep.subr.mxu0 0.0
    %86 = vmatpush1.msra.mxu0 %v72
    %87 = vmatprep.subr.mxu0 0.0
    %88 = vmatpush1.msra.mxu0 %v71
    %89 = vmatprep.subr.mxu0 0.0
    %90 = vmatpush1.msra.mxu0 %v70
    %91 = vmatprep.subr.mxu0 0.0
    %92 = vmatpush1.msra.mxu0 %v69
    %93 = vmatprep.subr.mxu0 0.0
    %94 = vmatpush1.msra.mxu0 %v68
    %95 = vmatprep.subr.mxu0 0.0
    %96 = vmatpush1.msra.mxu0 %v67
    %97 = vmatprep.subr.mxu0 0.0
    %98 = vmatpush1.msra.mxu0 %v66
    %99 = vmatprep.subr.mxu0 0.0
    %100 = vmatpush1.msra.mxu0 %v65
    %101 = vmatprep.subr.mxu0 0.0
    %102 = vmatpush1.msra.mxu0 %v64
    %103 = vmatprep.subr.mxu0 0.0
    %104 = vmatpush1.msra.mxu0 %v63
    %105 = vmatprep.subr.mxu0 0.0
    %106 = vmatpush1.msra.mxu0 %v62
    %107 = vmatprep.subr.mxu0 0.0
    %108 = vmatpush1.msra.mxu0 %v61
    %109 = vmatprep.subr.mxu0 0.0
    %110 = vmatpush2.msra.mxu0 0.0
    %111 = vmatprep.subr.mxu0 0.0
    %112 = vmatpush2.msra.mxu0 0.0
    %113 = vmatprep.subr.mxu0 0.0
    %114 = vmatpush2.msra.mxu0 0.0
    %115 = vmatprep.subr.mxu0 0.0
    %116 = vmatpush2.msra.mxu0 0.0
    %117 = vmatprep.subr.mxu0 0.0
    %118 = vmatpush2.msra.mxu0 0.0
    %119 = vmatprep.subr.mxu0 0.0
    %120 = vmatpush2.msra.mxu0 0.0
    %121 = vmatprep.subr.mxu0 0.0
    %122 = vmatpush2.msra.mxu0 0.0
    %123 = vmatprep.subr.mxu0 0.0
    %124 = vmatpush2.msra.mxu0 0.0
    %125 = vmatprep.subr.mxu0 0.0
    %126 = vmatpush2.msra.mxu0 0.0
    %127 = vmatprep.subr.mxu0 0.0
    %128 = vmatpush2.msra.mxu0 0.0
    %129 = vmatprep.subr.mxu0 0.0
    %130 = vmatpush2.msra.mxu0 0.0
    %131 = vmatprep.subr.mxu0 0.0
    %132 = vmatpush2.msra.mxu0 0.0
    %133 = vmatprep.subr.mxu0 0.0
    %134 = vmatpush2.msra.mxu0 0.0
    %135 = vmatprep.subr.mxu0 0.0
    %136 = vmatpush2.msra.mxu0 0.0
    %137 = vmatprep.subr.mxu0 0.0
    %138 = vmatpush2.msra.mxu0 0.0
    %139 = vmatprep.subr.mxu0 0.0
    %140 = vmatpush2.msra.mxu0 0.0
    %141 = vmatprep.mubr.f32.mxu0 0.0
    %142 = vmatmul.mubr.f32.gmra.mxu0 %v60
    %v143 = vpop.f32.mrf.mxu0
    %v144 = vadd.f32 0.0, %v143
    %v145 = vpop.f32.mrf.mxu0
    %146 = vdwg.mxu0
    %v147 = vadd.f32 %v59, %v144
    %148 = vst [vmem:[#allocation2] sm:$0xff] %v147
    // Predicated region
    $region30: #{tpu_custom_call.1} parent=1 // pred_check
      %p149 = pneg %p41
    $region31: #{tpu_custom_call.1} parent=1 // pred_check_branch
      %151 = sbr.rel (%p149) target = $region33
    $region32: #{tpu_custom_call.1} parent=1 // pred_region
      %v152 = vld [vmem:[#allocation2] sm:$0xff]
      %v153 = vmax.f32 %v152, 0.0
      %v154 = vld [vmem:[#allocation3] sm:$0xff]
      %v155 = vadd.f32 %v154, %v153
      %156 = vst [vmem:[#allocation9] sm:$0xff] %v155
    $region33: #{tpu_custom_call.1} parent=1 // pred_fallthru
      _
    // Predicated region
    $region34: #{tpu_custom_call.1} parent=1 // pred_check
      _
    $region35: #{tpu_custom_call.1} parent=1 // pred_check_branch
      %158 = sbr.rel (0) target = $region37
    $region36: #{tpu_custom_call.1} parent=1 // pred_region
      %s160 = ssub.s32 128, 128
      %161 = vsyncadd [#allocation6], %s160
      %s163 = sshll.u32 [#allocation9], 4
      %s164 = int_to_ptr.vmem [resolvable:$true] %s163
      %166 = dma.vmem_to_hbm [thread:$0]  %s164, 128, %s3, [#allocation6]
    $region37: #{tpu_custom_call.1} parent=1 // pred_fallthru
      _
    // Predicated region
    $region38: #{tpu_custom_call.1} parent=1 // pred_check
      _
    $region39: #{tpu_custom_call.1} parent=1 // pred_check_branch
      %168 = sbr.rel (0) target = $region41
    $region40: #{tpu_custom_call.1} parent=1 // pred_region
      %169 = dma.done [#allocation6], 128
    $region41: #{tpu_custom_call.1} parent=1 // pred_fallthru
      _
    %170 = vsyncpa [#allocation5], 1
    %171 = vsyncpa [#allocation8], 1
    %172 = vsyncpa [#allocation6], 1

</llo_original>
